<compile_context>
chip_gen: v6e
topology: v6e:2x2x1
jax: 0.10.0
libtpu: 0.0.40
codegen_flags: <defaults>
</compile_context>

<pallas_src>
import functools

import jax
import jax.numpy as jnp
from jax import lax
from jax.experimental import pallas as pl
from jax.experimental.pallas import tpu as pltpu


# --------------------------------------------------------------------------- #
# Kernel
# --------------------------------------------------------------------------- #
def _nkn_kernel(x_ref, w_ref, b_ref, o_ref, acc_ref, *, precision):
    # x_ref: (TM, TK), w_ref: (TK, TN), b_ref: (1, TN) f32,
    # o_ref: (TM, TN), acc_ref: (TM, TN) f32 scratch.  K axis is grid axis 2.
    k = pl.program_id(2)

    @pl.when(k == 0)
    def _init():
        acc_ref[...] = jnp.zeros_like(acc_ref)

    acc_ref[...] += jnp.dot(
        x_ref[...], w_ref[...],
        preferred_element_type=jnp.float32,
        precision=precision,
    )

    @pl.when(k == pl.num_programs(2) - 1)
    def _finish():
        y = acc_ref[...] + b_ref[...].astype(jnp.float32)   # broadcast (1,TN)
        o_ref[...] = jax.nn.sigmoid(y).astype(o_ref.dtype)   # EUP transcendental


# --------------------------------------------------------------------------- #
# Helpers
# --------------------------------------------------------------------------- #
def _round_up(a, m):
    return ((a + m - 1) // m) * m


def _vmem_budget():
    """Generation-aware soft VMEM budget (leave headroom for Mosaic scratch)."""
    try:
        phys = int(pltpu.get_tpu_info().vmem_capacity_bytes)
    except Exception:
        phys = 64 << 20  # conservative (v7x-sized) fallback
    return phys, max(min(phys - (16 << 20), 100 << 20), 24 << 20)


def _tile_candidates(dim, align, target):
    """Power-of-two multiples of `align` up to target, plus the fully-aligned dim."""
    full = _round_up(dim, align)
    cands = set()
    t = align
    cap = max(align, min(target, full))
    while t <= cap:
        cands.add(t)
        t *= 2
    if full <= target:
        cands.add(full)
    return sorted(cands)


def _choose_tiling(B, D_in, n128, in_bytes, out_bytes, budget,
                   tm_target, tn_target, max_tk):
    tm_cands = _tile_candidates(B, 8, tm_target)
    tn_cands = _tile_candidates(n128, 128, tn_target)
    tk_cands = [D_in] + [t for t in (1024, 512, 256, 128) if t < D_in]
    if max_tk is not None:
        filt = [t for t in tk_cands if t <= max_tk]
        tk_cands = filt or [min(tk_cands)]

    best, best_key = None, None
    for TK in tk_cands:
        for TN in tn_cands:
            for TM in tm_cands:
                # double-buffered x, w, bias, out tiles + single f32 accumulator
                need = (2 * (TM * TK + TK * TN) * in_bytes
                        + 2 * TN * 4
                        + 2 * TM * TN * out_bytes
                        + TM * TN * 4)
                fits = need <= budget
                B_pad = _round_up(B, TM)
                N_pad = _round_up(n128, TN)
                if TK == D_in:
                    K_pad, num_k = D_in, 1
                else:
                    K_pad = _round_up(D_in, TK)
                    num_k = K_pad // TK
                steps = (B_pad // TM) * (N_pad // TN) * num_k
                key = (0 if fits else 1,          # prefer configs inside the VMEM budget
                       0 if num_k == 1 else 1,    # prefer no K-tiling
                       B_pad * N_pad * K_pad,     # minimize padded work
                       steps,                     # then fewer grid steps (bigger tiles)
                       need)                      # then smaller VMEM footprint
                if best_key is None or key < best_key:
                    best_key = key
                    best = (TM, TN, TK, B_pad, N_pad, K_pad, num_k, need)
    return best


# --------------------------------------------------------------------------- #
# Parameter preparation (do ONCE per set of weights)
# --------------------------------------------------------------------------- #
def prepare_nkn_params(weight, bias, compute_dtype=jnp.bfloat16):
    """Transpose, lane-pad and cast the nn.Linear params once.

    Returns (w_t, bias2d, d_hidden):
      w_t    : (D_in, N128) in compute_dtype (native MXU (K, N) layout)
      bias2d : (1, N128) float32
    """
    D_hidden, _ = weight.shape
    n128 = _round_up(D_hidden, 128)
    w_t = jnp.asarray(weight).T.astype(compute_dtype)            # (D_in, D_hidden)
    b = jnp.asarray(bias, jnp.float32)
    if n128 != D_hidden:
        w_t = jnp.pad(w_t, ((0, 0), (0, n128 - D_hidden)))
        b = jnp.pad(b, (0, n128 - D_hidden))
    return w_t, b.reshape(1, n128), D_hidden


# --------------------------------------------------------------------------- #
# Forward pass
# --------------------------------------------------------------------------- #
def nkn_block_prepared(x, w_t, bias2d, d_hidden, *, out_dtype=None,
                       tm_target=512, tn_target=512, max_tk=None):
    """sigmoid(x @ W^T + b) using pre-transposed/padded params from prepare_nkn_params."""
    B, D_in = x.shape
    assert w_t.shape[0] == D_in
    n128 = w_t.shape[1]
    compute_dtype = w_t.dtype
    out_dtype = x.dtype if out_dtype is None else out_dtype
    in_bytes = jnp.dtype(compute_dtype).itemsize
    out_bytes = jnp.dtype(out_dtype).itemsize

    phys, budget = _vmem_budget()
    TM, TN, TK, B_pad, N_pad, K_pad, num_k, need = _choose_tiling(
        B, D_in, n128, in_bytes, out_bytes, budget, tm_target, tn_target, max_tk)
    num_b = B_pad // TM
    num_n = N_pad // TN

    # ---- per-call padding / cast (weights already prepared; usually no-op) --
    x_c = x.astype(compute_dtype)
    if B_pad != B or K_pad != D_in:
        x_c = jnp.pad(x_c, ((0, B_pad - B), (0, K_pad - D_in)))
    w_c = w_t
    if K_pad != D_in or N_pad != n128:
        w_c = jnp.pad(w_c, ((0, K_pad - D_in), (0, N_pad - n128)))
    b_c = bias2d
    if N_pad != n128:
        b_c = jnp.pad(b_c, ((0, 0), (0, N_pad - n128)))

    # ---- grid order: make the cheaper-to-keep operand resident -------------
    x_bytes = B_pad * K_pad * in_bytes
    w_bytes = K_pad * N_pad * in_bytes
    if num_k == 1:
        extra_n_first = ((num_n - 1) * x_bytes) if num_b > 1 else 0   # x streams
        extra_b_first = ((num_b - 1) * w_bytes) if num_n > 1 else 0   # w streams
        n_first = extra_n_first < extra_b_first
        if extra_n_first == extra_b_first:
            n_first = num_n >= num_b          # free: give megacore the bigger axis
    else:
        n_first = num_n >= num_b              # K-tiled: both stream either way

    if n_first:
        grid = (num_n, num_b, num_k)
        x_map = lambda n, b, k: (b, k)
        w_map = lambda n, b, k: (k, n)
        bias_map = lambda n, b, k: (0, n)
        out_map = lambda n, b, k: (b, n)
        w_passes = 1 if num_k == 1 else num_b
        x_passes = (num_n if num_b > 1 else 1) if num_k == 1 else num_n
    else:
        grid = (num_b, num_n, num_k)
        x_map = lambda b, n, k: (b, k)
        w_map = lambda b, n, k: (k, n)
        bias_map = lambda b, n, k: (0, n)
        out_map = lambda b, n, k: (b, n)
        w_passes = (num_b if num_n > 1 else 1) if num_k == 1 else num_b
        x_passes = 1 if num_k == 1 else num_n

    vmem_limit = int(min(need + (4 << 20), budget))
    if vmem_limit < need:                       # fallback config above soft budget
        vmem_limit = int(min(need + (4 << 20), phys))
    vmem_limit = max(vmem_limit, 16 << 20)

    cost = pl.CostEstimate(
        flops=2 * B_pad * K_pad * N_pad,
        transcendentals=B_pad * N_pad,
        bytes_accessed=(x_passes * x_bytes + w_passes * w_bytes
                        + N_pad * 4 + B_pad * N_pad * out_bytes),
    )

    precision = (lax.Precision.HIGHEST if compute_dtype == jnp.float32
                 else lax.Precision.DEFAULT)

    out_p = pl.pallas_call(
        functools.partial(_nkn_kernel, precision=precision),
        out_shape=jax.ShapeDtypeStruct((B_pad, N_pad), out_dtype),
        grid_spec=pltpu.PrefetchScalarGridSpec(
            num_scalar_prefetch=0,
            grid=grid,
            in_specs=[
                pl.BlockSpec((TM, TK), x_map),
                pl.BlockSpec((TK, TN), w_map),
                pl.BlockSpec((1, TN), bias_map),
            ],
            out_specs=pl.BlockSpec((TM, TN), out_map),
            scratch_shapes=[pltpu.VMEM((TM, TN), jnp.float32)],
        ),
        compiler_params=pltpu.CompilerParams(
            dimension_semantics=("parallel", "parallel", "arbitrary"),
            vmem_limit_bytes=vmem_limit,
        ),
        cost_estimate=cost,
    )(x_c, w_c, b_c)

    return out_p[:B, :d_hidden]


def nkn_block(x, weight, bias, *, compute_dtype=jnp.bfloat16, out_dtype=None,
              tm_target=512, tn_target=512, max_tk=None):
    """Convenience wrapper (torch nn.Linear layout).

    For repeated calls with the same weights, call prepare_nkn_params() once
    and use nkn_block_prepared() to avoid re-doing the transpose/pad/cast.
    """
    w_t, bias2d, d_hidden = prepare_nkn_params(weight, bias, compute_dtype)
    return nkn_block_prepared(x, w_t, bias2d, d_hidden, out_dtype=out_dtype,
                              tm_target=tm_target, tn_target=tn_target,
                              max_tk=max_tk)


def reference(x, weight, bias):
    return jax.nn.sigmoid(x @ weight.T + bias)


# --------------------------------------------------------------------------- #
# Self-test
# --------------------------------------------------------------------------- #
if __name__ == "__main__":
    key = jax.random.PRNGKey(0)
    kx, kw, kb = jax.random.split(key, 3)

    batch, input_dim, hidden_dim = 8, 16, 32
    x = jax.random.normal(kx, (batch, input_dim), dtype=jnp.float32)
    bound = 1.0 / (input_dim ** 0.5)
    weight = jax.random.uniform(kw, (hidden_dim, input_dim),
                                minval=-bound, maxval=bound, dtype=jnp.float32)
    bias = jax.random.uniform(kb, (hidden_dim,),
                              minval=-bound, maxval=bound, dtype=jnp.float32)
    ref = reference(x, weight, bias)

    # 1) strict f32 path
    out_f32 = jax.block_until_ready(
        nkn_block(x, weight, bias, compute_dtype=jnp.float32))
    assert out_f32.shape == (batch, hidden_dim)
    assert jnp.allclose(out_f32, ref, atol=1e-5, rtol=1e-5)

    # 2) default bf16 MXU path (relaxed tolerance vs f32 reference)
    out_bf16 = jax.block_until_ready(nkn_block(x, weight, bias))
    assert out_bf16.shape == (batch, hidden_dim)
    assert jnp.allclose(out_bf16, ref, atol=2e-2, rtol=2e-2)

    # 3) padded-B / padded-N shape with forced K-tiling (exercises accumulator)
    b2, d2, h2 = 36, 384, 200
    k2x, k2w, k2b = jax.random.split(jax.random.PRNGKey(1), 3)
    x2 = jax.random.normal(k2x, (b2, d2), dtype=jnp.float32)
    w2 = jax.random.normal(k2w, (h2, d2), dtype=jnp.float32) * 0.05
    b2v = jax.random.normal(k2b, (h2,), dtype=jnp.float32) * 0.05
    ref2 = reference(x2, w2, b2v)
    out2 = jax.block_until_ready(
        nkn_block(x2, w2, b2v, compute_dtype=jnp.float32, max_tk=128))
    assert out2.shape == (b2, h2)
    assert jnp.allclose(out2, ref2, atol=1e-4, rtol=1e-4)

    print("KERNEL_OK")
</pallas_src>

<mosaic_0001>
module attributes {stable_mosaic.version = 11 : i64} {
  func.func @_nkn_kernel(%arg0: i32, %arg1: i32, %arg2: i32, %arg3: memref<8x16xf32, #tpu.memory_space<vmem>>, %arg4: memref<16x128xf32, #tpu.memory_space<vmem>>, %arg5: memref<1x128xf32, #tpu.memory_space<vmem>>, %arg6: memref<8x128xf32, #tpu.memory_space<vmem>>, %arg7: memref<8x128xf32, #tpu.memory_space<vmem>>) attributes {dimension_semantics = [#tpu.dimension_semantics<parallel>, #tpu.dimension_semantics<parallel>, #tpu.dimension_semantics<arbitrary>], iteration_bounds = array<i64: 1, 1, 1>, scalar_prefetch = 0 : i64, scratch_operands = 1 : i64, tpu.core_type = #tpu.core_type<tc>, window_params = [{transform_indices = @transform_0, window_bounds = array<i64: 8, 16>}, {transform_indices = @transform_1, window_bounds = array<i64: 16, 128>}, {transform_indices = @transform_2, window_bounds = array<i64: 1, 128>}, {transform_indices = @transform_3, window_bounds = array<i64: 8, 128>}]} {
    %c0_i32 = arith.constant 0 : i32
    %0 = arith.cmpi eq, %arg2, %c0_i32 : i32
    %1 = arith.extui %0 : i1 to i32
    %c0_i32_0 = arith.constant 0 : i32
    %2 = arith.cmpi ne, %1, %c0_i32_0 : i32
    scf.if %2 {
      %cst_10 = arith.constant 0.000000e+00 : f32
      %12 = vector.broadcast %cst_10 : f32 to vector<8x128xf32>
      %c0_11 = arith.constant 0 : index
      %c0_12 = arith.constant 0 : index
      %13 = vector.load %arg7[%c0_11, %c0_12] : memref<8x128xf32, #tpu.memory_space<vmem>>, vector<8x128xf32>
      tpu.vector_store %arg7[%c0_11, %c0_12], %12 {strides = array<i32>} : memref<8x128xf32, #tpu.memory_space<vmem>>, vector<8x128xf32>,
    } else {
    }
    %c0 = arith.constant 0 : index
    %c0_1 = arith.constant 0 : index
    %3 = vector.load %arg7[%c0, %c0_1] : memref<8x128xf32, #tpu.memory_space<vmem>>, vector<8x128xf32>
    %c0_2 = arith.constant 0 : index
    %c0_3 = arith.constant 0 : index
    %4 = vector.load %arg3[%c0_2, %c0_3] : memref<8x16xf32, #tpu.memory_space<vmem>>, vector<8x16xf32>
    %c0_4 = arith.constant 0 : index
    %c0_5 = arith.constant 0 : index
    %5 = vector.load %arg4[%c0_4, %c0_5] : memref<16x128xf32, #tpu.memory_space<vmem>>, vector<16x128xf32>
    %cst = arith.constant dense<0.000000e+00> : vector<8x128xf32>
    %6 = tpu.matmul %4, %5, %cst {dimension_numbers = #tpu.dot_dimension_numbers<[1], [0], [0], [1], [0, 0, 1, 1], [], []>, precision = #tpu.contract_precision<fp32>} : vector<8x16xf32>, vector<16x128xf32>, vector<8x128xf32> -> vector<8x128xf32>
    %7 = arith.addf %3, %6 : vector<8x128xf32>
    %c0_6 = arith.constant 0 : index
    %c0_7 = arith.constant 0 : index
    %8 = vector.load %arg7[%c0_6, %c0_7] : memref<8x128xf32, #tpu.memory_space<vmem>>, vector<8x128xf32>
    tpu.vector_store %arg7[%c0_6, %c0_7], %7 {strides = array<i32>} : memref<8x128xf32, #tpu.memory_space<vmem>>, vector<8x128xf32>,
    %c0_i32_8 = arith.constant 0 : i32
    %9 = arith.cmpi eq, %arg2, %c0_i32_8 : i32
    %10 = arith.extui %9 : i1 to i32
    %c0_i32_9 = arith.constant 0 : i32
    %11 = arith.cmpi ne, %10, %c0_i32_9 : i32
    scf.if %11 {
      %c0_10 = arith.constant 0 : index
      %c0_11 = arith.constant 0 : index
      %12 = vector.load %arg7[%c0_10, %c0_11] : memref<8x128xf32, #tpu.memory_space<vmem>>, vector<8x128xf32>
      %c0_12 = arith.constant 0 : index
      %c0_13 = arith.constant 0 : index
      %13 = vector.load %arg5[%c0_12, %c0_13] : memref<1x128xf32, #tpu.memory_space<vmem>>, vector<1x128xf32>
      %14 = vector.broadcast %13 : vector<1x128xf32> to vector<8x128xf32>
      %15 = arith.addf %12, %14 : vector<8x128xf32>
      %16 = arith.negf %15 : vector<8x128xf32>
      %17 = math.exp %16 : vector<8x128xf32>
      %cst_14 = arith.constant 1.000000e+00 : f32
      %18 = vector.broadcast %cst_14 : f32 to vector<8x128xf32>
      %19 = arith.addf %18, %17 : vector<8x128xf32>
      %20 = arith.divf %18, %19 : vector<8x128xf32>
      %c0_15 = arith.constant 0 : index
      %c0_16 = arith.constant 0 : index
      %21 = vector.load %arg6[%c0_15, %c0_16] : memref<8x128xf32, #tpu.memory_space<vmem>>, vector<8x128xf32>
      tpu.vector_store %arg6[%c0_15, %c0_16], %20 {strides = array<i32>} : memref<8x128xf32, #tpu.memory_space<vmem>>, vector<8x128xf32>,
    } else {
    }
    return
  }
  func.func @transform_0(%arg0: i32, %arg1: i32, %arg2: i32) -> (i32, i32) {
    %c0_i32 = arith.constant 0 : i32
    return %arg1, %arg2 : i32, i32
  }
  func.func @transform_1(%arg0: i32, %arg1: i32, %arg2: i32) -> (i32, i32) {
    %c0_i32 = arith.constant 0 : i32
    return %arg2, %arg0 : i32, i32
  }
  func.func @transform_2(%arg0: i32, %arg1: i32, %arg2: i32) -> (i32, i32) {
    %c0_i32 = arith.constant 0 : i32
    %c0_i32_0 = arith.constant 0 : i32
    return %c0_i32, %arg0 : i32, i32
  }
  func.func @transform_3(%arg0: i32, %arg1: i32, %arg2: i32) -> (i32, i32) {
    %c0_i32 = arith.constant 0 : i32
    return %arg1, %arg0 : i32, i32
  }
}

</mosaic_0001>

<llo_original>
// kernel: tpu_custom_call.1
$region0: #{tpu_custom_call.1}
  #allocation0 [shape = 'u32[]', space=smem, size = 0x4, offset = 0x4, fixed_abs, tag = 'smem constant byte address 0x4 - core index']
  #allocation1 [shape = 'u32[144,128]{1,0:T(1,128)}', space=vmem, size = 0x12000, scoped, tag = 'internal scratch']
  #allocation2 [shape = 'f32[8,128]{1,0:T(8,128)}', space=vmem, size = 0x1000, scoped, tag = 'scratch operand']
  %s0 = inlined_call_operand.hbm [shape: f32[8,16], index: 0, kind: input, shape index: {}]
  %s1 = inlined_call_operand.hbm [shape: f32[16,128], index: 1, kind: input, shape index: {}]
  %s2 = inlined_call_operand.vmem [shape: f32[1,128], index: 2, kind: input, shape index: {}]
  %s3 = inlined_call_operand.hbm [shape: f32[8,128], index: 3, kind: output, shape index: {}]
  %s4 = sld [smem:[#allocation0]]
  $region38: #{tpu_custom_call.1} parent=0
    _
  %s6 = ssub.s32 1, %s4
  %s7 = scalar_select 0, %s6, %s4
  $region1: #{tpu_custom_call.1} parent=0
    #allocation3 [shape = 'u8[4096]{0}', space=vmem, size = 0x1000, scoped, tag = 'input window, operand 0, single buffered']
    #allocation4 [shape = 's32[1]{0}', space=sflag, size = 0x4, scoped, tag = 'scoped memory for tpu_custom_call.1']
    #allocation5 [shape = 's32[1]{0}', space=sflag, size = 0x4, scoped, tag = 'scoped memory for tpu_custom_call.1']
    #allocation6 [shape = 'u8[8192]{0}', space=vmem, size = 0x2000, scoped, tag = 'input window, operand 1, single buffered']
    #allocation7 [shape = 's32[1]{0}', space=sflag, size = 0x4, scoped, tag = 'scoped memory for tpu_custom_call.1']
    #allocation8 [shape = 'u8[4096]{0}', space=vmem, size = 0x1000, scoped, tag = 'output window, operand 0, single buffered']
    %8 = vsyncpa [#allocation4], 0
    %9 = vsyncpa [#allocation7], 0
    %10 = vsyncpa [#allocation5], 0
    // Predicated region
    $region2: #{tpu_custom_call.1} parent=1 // pred_check
      _
    $region3: #{tpu_custom_call.1} parent=1 // pred_check_branch
      %12 = sbr.rel (0) target = $region5
    $region4: #{tpu_custom_call.1} parent=1 // pred_region
      %s14 = ssub.s32 128, 128
      %15 = vsyncadd [#allocation4], %s14
      %s17 = sshll.u32 [#allocation3], 4
      %s18 = int_to_ptr.vmem [resolvable:$true] %s17
      %20 = dma.hbm_to_vmem [thread:$0]  %s0, 128, %s18, [#allocation4]
    $region5: #{tpu_custom_call.1} parent=1 // pred_fallthru
      _
    // Predicated region
    $region6: #{tpu_custom_call.1} parent=1 // pred_check
      _
    $region7: #{tpu_custom_call.1} parent=1 // pred_check_branch
      %22 = sbr.rel (0) target = $region9
    $region8: #{tpu_custom_call.1} parent=1 // pred_region
      %s24 = ssub.s32 256, 256
      %25 = vsyncadd [#allocation7], %s24
      %s26 = sshll.u32 [#allocation6], 4
      %s27 = int_to_ptr.vmem [resolvable:$true] %s26
      %32 = dma.hbm_to_vmem [thread:$0]  %s1, 256, %s27, [#allocation7], 128, 128, 8
    $region9: #{tpu_custom_call.1} parent=1 // pred_fallthru
      _
    // Predicated region
    $region10: #{tpu_custom_call.1} parent=1 // pred_check
      _
    $region11: #{tpu_custom_call.1} parent=1 // pred_check_branch
      %34 = sbr.rel (0) target = $region13
    $region12: #{tpu_custom_call.1} parent=1 // pred_region
      _
    $region13: #{tpu_custom_call.1} parent=1 // pred_fallthru
      _
    // Predicated region
    $region14: #{tpu_custom_call.1} parent=1 // pred_check
      _
    $region15: #{tpu_custom_call.1} parent=1 // pred_check_branch
      %36 = sbr.rel (0) target = $region17
    $region16: #{tpu_custom_call.1} parent=1 // pred_region
      %37 = dma.done [#allocation4], 128
    $region17: #{tpu_custom_call.1} parent=1 // pred_fallthru
      _
    // Predicated region
    $region18: #{tpu_custom_call.1} parent=1 // pred_check
      _
    $region19: #{tpu_custom_call.1} parent=1 // pred_check_branch
      %39 = sbr.rel (0) target = $region21
    $region20: #{tpu_custom_call.1} parent=1 // pred_region
      %40 = dma.done [#allocation7], 256
    $region21: #{tpu_custom_call.1} parent=1 // pred_fallthru
      _
    %p41 = scmp.eq.s32.totalorder 0, 0
    // Predicated region
    $region22: #{tpu_custom_call.1} parent=1 // pred_check
      %p42 = pneg %p41
    $region23: #{tpu_custom_call.1} parent=1 // pred_check_branch
      %44 = sbr.rel (%p42) target = $region25
    $region24: #{tpu_custom_call.1} parent=1 // pred_region
      %45 = vst [vmem:[#allocation2] sm:$0xff] 0.0
    $region25: #{tpu_custom_call.1} parent=1 // pred_fallthru
      _
    %v46 = vld [vmem:[#allocation2] sm:$0xff]
    %v47 = vld [vmem:[#allocation3] sm:$0xff]
    %v48 = vld [vmem:[#allocation6] sm:$0xff]
    %v49 = vld [vmem:[#allocation6 + $0x8] sm:$0xff]
    %vm50 = vcmask 130048
    %v52 = vsel %vm50, %v47, 0
    %54 = vmatprep.subr.mxu0 0.0
    %55 = vmatpush1.msra.mxu0 0.0
    %56 = vmatprep.subr.mxu0 0.0
    %57 = vmatpush1.msra.mxu0 0.0
    %58 = vmatprep.subr.mxu0 0.0
    %59 = vmatpush1.msra.mxu0 0.0
    %60 = vmatprep.subr.mxu0 0.0
    %61 = vmatpush1.msra.mxu0 0.0
    %62 = vmatprep.subr.mxu0 0.0
    %63 = vmatpush1.msra.mxu0 0.0
    %64 = vmatprep.subr.mxu0 0.0
    %65 = vmatpush1.msra.mxu0 0.0
    %66 = vmatprep.subr.mxu0 0.0
    %67 = vmatpush1.msra.mxu0 0.0
    %68 = vmatprep.subr.mxu0 0.0
    %69 = vmatpush1.msra.mxu0 0.0
    %70 = vmatprep.subr.mxu0 0.0
    %71 = vmatpush1.msra.mxu0 0.0
    %72 = vmatprep.subr.mxu0 0.0
    %73 = vmatpush1.msra.mxu0 0.0
    %74 = vmatprep.subr.mxu0 0.0
    %75 = vmatpush1.msra.mxu0 0.0
    %76 = vmatprep.subr.mxu0 0.0
    %77 = vmatpush1.msra.mxu0 0.0
    %78 = vmatprep.subr.mxu0 0.0
    %79 = vmatpush1.msra.mxu0 0.0
    %80 = vmatprep.subr.mxu0 0.0
    %81 = vmatpush1.msra.mxu0 0.0
    %82 = vmatprep.subr.mxu0 0.0
    %v83 = vand.u32 %v49, 4294901760
    %84 = vmatpush1.msra.mxu0 %v83
    %85 = vmatprep.subr.mxu0 0.0
    %v86 = vand.u32 %v48, 4294901760
    %87 = vmatpush1.msra.mxu0 %v86
    %88 = vmatprep.subr.mxu0 0.0
    %89 = vmatpush2.msra.mxu0 0.0
    %90 = vmatprep.subr.mxu0 0.0
    %91 = vmatpush2.msra.mxu0 0.0
    %92 = vmatprep.subr.mxu0 0.0
    %93 = vmatpush2.msra.mxu0 0.0
    %94 = vmatprep.subr.mxu0 0.0
    %95 = vmatpush2.msra.mxu0 0.0
    %96 = vmatprep.subr.mxu0 0.0
    %97 = vmatpush2.msra.mxu0 0.0
    %98 = vmatprep.subr.mxu0 0.0
    %99 = vmatpush2.msra.mxu0 0.0
    %100 = vmatprep.subr.mxu0 0.0
    %101 = vmatpush2.msra.mxu0 0.0
    %102 = vmatprep.subr.mxu0 0.0
    %103 = vmatpush2.msra.mxu0 0.0
    %104 = vmatprep.subr.mxu0 0.0
    %105 = vmatpush2.msra.mxu0 0.0
    %106 = vmatprep.subr.mxu0 0.0
    %107 = vmatpush2.msra.mxu0 0.0
    %108 = vmatprep.subr.mxu0 0.0
    %109 = vmatpush2.msra.mxu0 0.0
    %110 = vmatprep.subr.mxu0 0.0
    %111 = vmatpush2.msra.mxu0 0.0
    %112 = vmatprep.subr.mxu0 0.0
    %113 = vmatpush2.msra.mxu0 0.0
    %114 = vmatprep.subr.mxu0 0.0
    %115 = vmatpush2.msra.mxu0 0.0
    %116 = vmatprep.subr.mxu0 0.0
    %117 = vmatpush2.msra.mxu0 0.0
    %118 = vmatprep.subr.mxu0 0.0
    %119 = vmatpush2.msra.mxu0 0.0
    %120 = vmatprep.mubr.f32.mxu0 0.0
    %v121 = vand.u32 %v52, 4294901760
    %v122 = vsub.f32 %v52, %v121
    %v123 = vand.u32 %v122, 4294901760
    %v124 = vsub.f32 %v122, %v123
    %v125 = vand.u32 %v124, 4294901760
    %126 = vmatmul.mubr.f32.gmra.mxu0 %v125
    %v127 = vpop.f32.mrf.mxu0
    %v128 = vadd.f32 0.0, %v127
    %v129 = vpop.f32.mrf.mxu0
    %130 = vdwg.mxu0
    %131 = vmatprep.subr.mxu0 0.0
    %132 = vmatpush1.msra.mxu0 0.0
    %133 = vmatprep.subr.mxu0 0.0
    %134 = vmatpush1.msra.mxu0 0.0
    %135 = vmatprep.subr.mxu0 0.0
    %136 = vmatpush1.msra.mxu0 0.0
    %137 = vmatprep.subr.mxu0 0.0
    %138 = vmatpush1.msra.mxu0 0.0
    %139 = vmatprep.subr.mxu0 0.0
    %140 = vmatpush1.msra.mxu0 0.0
    %141 = vmatprep.subr.mxu0 0.0
    %142 = vmatpush1.msra.mxu0 0.0
    %143 = vmatprep.subr.mxu0 0.0
    %144 = vmatpush1.msra.mxu0 0.0
    %145 = vmatprep.subr.mxu0 0.0
    %146 = vmatpush1.msra.mxu0 0.0
    %147 = vmatprep.subr.mxu0 0.0
    %148 = vmatpush1.msra.mxu0 0.0
    %149 = vmatprep.subr.mxu0 0.0
    %150 = vmatpush1.msra.mxu0 0.0
    %151 = vmatprep.subr.mxu0 0.0
    %152 = vmatpush1.msra.mxu0 0.0
    %153 = vmatprep.subr.mxu0 0.0
    %154 = vmatpush1.msra.mxu0 0.0
    %155 = vmatprep.subr.mxu0 0.0
    %156 = vmatpush1.msra.mxu0 0.0
    %157 = vmatprep.subr.mxu0 0.0
    %158 = vmatpush1.msra.mxu0 0.0
    %159 = vmatprep.subr.mxu0 0.0
    %v160 = vand.u32 %v49, 4294901760
    %v161 = vsub.f32 %v49, %v160
    %v162 = vand.u32 %v161, 4294901760
    %v163 = vsub.f32 %v161, %v162
    %v164 = vand.u32 %v163, 4294901760
    %165 = vmatpush1.msra.mxu0 %v164
    %166 = vmatprep.subr.mxu0 0.0
    %v167 = vand.u32 %v48, 4294901760
    %v168 = vsub.f32 %v48, %v167
    %v169 = vand.u32 %v168, 4294901760
    %v170 = vsub.f32 %v168, %v169
    %v171 = vand.u32 %v170, 4294901760
    %172 = vmatpush1.msra.mxu0 %v171
    %173 = vmatprep.subr.mxu0 0.0
    %174 = vmatpush2.msra.mxu0 0.0
    %175 = vmatprep.subr.mxu0 0.0
    %176 = vmatpush2.msra.mxu0 0.0
    %177 = vmatprep.subr.mxu0 0.0
    %178 = vmatpush2.msra.mxu0 0.0
    %179 = vmatprep.subr.mxu0 0.0
    %180 = vmatpush2.msra.mxu0 0.0
    %181 = vmatprep.subr.mxu0 0.0
    %182 = vmatpush2.msra.mxu0 0.0
    %183 = vmatprep.subr.mxu0 0.0
    %184 = vmatpush2.msra.mxu0 0.0
    %185 = vmatprep.subr.mxu0 0.0
    %186 = vmatpush2.msra.mxu0 0.0
    %187 = vmatprep.subr.mxu0 0.0
    %188 = vmatpush2.msra.mxu0 0.0
    %189 = vmatprep.subr.mxu0 0.0
    %190 = vmatpush2.msra.mxu0 0.0
    %191 = vmatprep.subr.mxu0 0.0
    %192 = vmatpush2.msra.mxu0 0.0
    %193 = vmatprep.subr.mxu0 0.0
    %194 = vmatpush2.msra.mxu0 0.0
    %195 = vmatprep.subr.mxu0 0.0
    %196 = vmatpush2.msra.mxu0 0.0
    %197 = vmatprep.subr.mxu0 0.0
    %198 = vmatpush2.msra.mxu0 0.0
    %199 = vmatprep.subr.mxu0 0.0
    %200 = vmatpush2.msra.mxu0 0.0
    %201 = vmatprep.subr.mxu0 0.0
    %202 = vmatpush2.msra.mxu0 0.0
    %203 = vmatprep.subr.mxu0 0.0
    %204 = vmatpush2.msra.mxu0 0.0
    %205 = vmatprep.mubr.f32.mxu0 0.0
    %v206 = vand.u32 %v52, 4294901760
    %207 = vmatmul.mubr.f32.gmra.mxu0 %v206
    %v208 = vpop.f32.mrf.mxu0
    %v209 = vadd.f32 %v128, %v208
    %v210 = vpop.f32.mrf.mxu0
    %211 = vdwg.mxu0
    %212 = vmatprep.subr.mxu0 0.0
    %213 = vmatpush1.msra.mxu0 0.0
    %214 = vmatprep.subr.mxu0 0.0
    %215 = vmatpush1.msra.mxu0 0.0
    %216 = vmatprep.subr.mxu0 0.0
    %217 = vmatpush1.msra.mxu0 0.0
    %218 = vmatprep.subr.mxu0 0.0
    %219 = vmatpush1.msra.mxu0 0.0
    %220 = vmatprep.subr.mxu0 0.0
    %221 = vmatpush1.msra.mxu0 0.0
    %222 = vmatprep.subr.mxu0 0.0
    %223 = vmatpush1.msra.mxu0 0.0
    %224 = vmatprep.subr.mxu0 0.0
    %225 = vmatpush1.msra.mxu0 0.0
    %226 = vmatprep.subr.mxu0 0.0
    %227 = vmatpush1.msra.mxu0 0.0
    %228 = vmatprep.subr.mxu0 0.0
    %229 = vmatpush1.msra.mxu0 0.0
    %230 = vmatprep.subr.mxu0 0.0
    %231 = vmatpush1.msra.mxu0 0.0
    %232 = vmatprep.subr.mxu0 0.0
    %233 = vmatpush1.msra.mxu0 0.0
    %234 = vmatprep.subr.mxu0 0.0
    %235 = vmatpush1.msra.mxu0 0.0
    %236 = vmatprep.subr.mxu0 0.0
    %237 = vmatpush1.msra.mxu0 0.0
    %238 = vmatprep.subr.mxu0 0.0
    %239 = vmatpush1.msra.mxu0 0.0
    %240 = vmatprep.subr.mxu0 0.0
    %v241 = vand.u32 %v49, 4294901760
    %v242 = vsub.f32 %v49, %v241
    %243 = vmatpush1.msra.mxu0 %v242
    %244 = vmatprep.subr.mxu0 0.0
    %v245 = vand.u32 %v48, 4294901760
    %v246 = vsub.f32 %v48, %v245
    %247 = vmatpush1.msra.mxu0 %v246
    %248 = vmatprep.subr.mxu0 0.0
    %249 = vmatpush2.msra.mxu0 0.0
    %250 = vmatprep.subr.mxu0 0.0
    %251 = vmatpush2.msra.mxu0 0.0
    %252 = vmatprep.subr.mxu0 0.0
    %253 = vmatpush2.msra.mxu0 0.0
    %254 = vmatprep.subr.mxu0 0.0
    %255 = vmatpush2.msra.mxu0 0.0
    %256 = vmatprep.subr.mxu0 0.0
    %257 = vmatpush2.msra.mxu0 0.0
    %258 = vmatprep.subr.mxu0 0.0
    %259 = vmatpush2.msra.mxu0 0.0
    %260 = vmatprep.subr.mxu0 0.0
    %261 = vmatpush2.msra.mxu0 0.0
    %262 = vmatprep.subr.mxu0 0.0
    %263 = vmatpush2.msra.mxu0 0.0
    %264 = vmatprep.subr.mxu0 0.0
    %265 = vmatpush2.msra.mxu0 0.0
    %266 = vmatprep.subr.mxu0 0.0
    %267 = vmatpush2.msra.mxu0 0.0
    %268 = vmatprep.subr.mxu0 0.0
    %269 = vmatpush2.msra.mxu0 0.0
    %270 = vmatprep.subr.mxu0 0.0
    %271 = vmatpush2.msra.mxu0 0.0
    %272 = vmatprep.subr.mxu0 0.0
    %273 = vmatpush2.msra.mxu0 0.0
    %274 = vmatprep.subr.mxu0 0.0
    %275 = vmatpush2.msra.mxu0 0.0
    %276 = vmatprep.subr.mxu0 0.0
    %277 = vmatpush2.msra.mxu0 0.0
    %278 = vmatprep.subr.mxu0 0.0
    %279 = vmatpush2.msra.mxu0 0.0
    %280 = vmatprep.mubr.f32.mxu0 0.0
    %v281 = vand.u32 %v52, 4294901760
    %v282 = vsub.f32 %v52, %v281
    %283 = vmatmul.mubr.f32.gmra.mxu0 %v282
    %v284 = vpop.f32.mrf.mxu0
    %v285 = vadd.f32 %v209, %v284
    %v286 = vpop.f32.mrf.mxu0
    %287 = vdwg.mxu0
    %288 = vmatprep.subr.mxu0 0.0
    %289 = vmatpush1.msra.mxu0 0.0
    %290 = vmatprep.subr.mxu0 0.0
    %291 = vmatpush1.msra.mxu0 0.0
    %292 = vmatprep.subr.mxu0 0.0
    %293 = vmatpush1.msra.mxu0 0.0
    %294 = vmatprep.subr.mxu0 0.0
    %295 = vmatpush1.msra.mxu0 0.0
    %296 = vmatprep.subr.mxu0 0.0
    %297 = vmatpush1.msra.mxu0 0.0
    %298 = vmatprep.subr.mxu0 0.0
    %299 = vmatpush1.msra.mxu0 0.0
    %300 = vmatprep.subr.mxu0 0.0
    %301 = vmatpush1.msra.mxu0 0.0
    %302 = vmatprep.subr.mxu0 0.0
    %303 = vmatpush1.msra.mxu0 0.0
    %304 = vmatprep.subr.mxu0 0.0
    %305 = vmatpush1.msra.mxu0 0.0
    %306 = vmatprep.subr.mxu0 0.0
    %307 = vmatpush1.msra.mxu0 0.0
    %308 = vmatprep.subr.mxu0 0.0
    %309 = vmatpush1.msra.mxu0 0.0
    %310 = vmatprep.subr.mxu0 0.0
    %311 = vmatpush1.msra.mxu0 0.0
    %312 = vmatprep.subr.mxu0 0.0
    %313 = vmatpush1.msra.mxu0 0.0
    %314 = vmatprep.subr.mxu0 0.0
    %315 = vmatpush1.msra.mxu0 0.0
    %316 = vmatprep.subr.mxu0 0.0
    %v317 = vand.u32 %v49, 4294901760
    %318 = vmatpush1.msra.mxu0 %v317
    %319 = vmatprep.subr.mxu0 0.0
    %v320 = vand.u32 %v48, 4294901760
    %321 = vmatpush1.msra.mxu0 %v320
    %322 = vmatprep.subr.mxu0 0.0
    %323 = vmatpush2.msra.mxu0 0.0
    %324 = vmatprep.subr.mxu0 0.0
    %325 = vmatpush2.msra.mxu0 0.0
    %326 = vmatprep.subr.mxu0 0.0
    %327 = vmatpush2.msra.mxu0 0.0
    %328 = vmatprep.subr.mxu0 0.0
    %329 = vmatpush2.msra.mxu0 0.0
    %330 = vmatprep.subr.mxu0 0.0
    %331 = vmatpush2.msra.mxu0 0.0
    %332 = vmatprep.subr.mxu0 0.0
    %333 = vmatpush2.msra.mxu0 0.0
    %334 = vmatprep.subr.mxu0 0.0
    %335 = vmatpush2.msra.mxu0 0.0
    %336 = vmatprep.subr.mxu0 0.0
    %337 = vmatpush2.msra.mxu0 0.0
    %338 = vmatprep.subr.mxu0 0.0
    %339 = vmatpush2.msra.mxu0 0.0
    %340 = vmatprep.subr.mxu0 0.0
    %341 = vmatpush2.msra.mxu0 0.0
    %342 = vmatprep.subr.mxu0 0.0
    %343 = vmatpush2.msra.mxu0 0.0
    %344 = vmatprep.subr.mxu0 0.0
    %345 = vmatpush2.msra.mxu0 0.0
    %346 = vmatprep.subr.mxu0 0.0
    %347 = vmatpush2.msra.mxu0 0.0
    %348 = vmatprep.subr.mxu0 0.0
    %349 = vmatpush2.msra.mxu0 0.0
    %350 = vmatprep.subr.mxu0 0.0
    %351 = vmatpush2.msra.mxu0 0.0
    %352 = vmatprep.subr.mxu0 0.0
    %353 = vmatpush2.msra.mxu0 0.0
    %354 = vmatprep.mubr.f32.mxu0 0.0
    %v355 = vand.u32 %v52, 4294901760
    %v356 = vsub.f32 %v52, %v355
    %v357 = vand.u32 %v356, 4294901760
    %358 = vmatmul.mubr.f32.gmra.mxu0 %v357
    %v359 = vpop.f32.mrf.mxu0
    %v360 = vadd.f32 %v285, %v359
    %v361 = vpop.f32.mrf.mxu0
    %362 = vdwg.mxu0
    %363 = vmatprep.subr.mxu0 0.0
    %364 = vmatpush1.msra.mxu0 0.0
    %365 = vmatprep.subr.mxu0 0.0
    %366 = vmatpush1.msra.mxu0 0.0
    %367 = vmatprep.subr.mxu0 0.0
    %368 = vmatpush1.msra.mxu0 0.0
    %369 = vmatprep.subr.mxu0 0.0
    %370 = vmatpush1.msra.mxu0 0.0
    %371 = vmatprep.subr.mxu0 0.0
    %372 = vmatpush1.msra.mxu0 0.0
    %373 = vmatprep.subr.mxu0 0.0
    %374 = vmatpush1.msra.mxu0 0.0
    %375 = vmatprep.subr.mxu0 0.0
    %376 = vmatpush1.msra.mxu0 0.0
    %377 = vmatprep.subr.mxu0 0.0
    %378 = vmatpush1.msra.mxu0 0.0
    %379 = vmatprep.subr.mxu0 0.0
    %380 = vmatpush1.msra.mxu0 0.0
    %381 = vmatprep.subr.mxu0 0.0
    %382 = vmatpush1.msra.mxu0 0.0
    %383 = vmatprep.subr.mxu0 0.0
    %384 = vmatpush1.msra.mxu0 0.0
    %385 = vmatprep.subr.mxu0 0.0
    %386 = vmatpush1.msra.mxu0 0.0
    %387 = vmatprep.subr.mxu0 0.0
    %388 = vmatpush1.msra.mxu0 0.0
    %389 = vmatprep.subr.mxu0 0.0
    %390 = vmatpush1.msra.mxu0 0.0
    %391 = vmatprep.subr.mxu0 0.0
    %v392 = vand.u32 %v49, 4294901760
    %v393 = vsub.f32 %v49, %v392
    %v394 = vand.u32 %v393, 4294901760
    %395 = vmatpush1.msra.mxu0 %v394
    %396 = vmatprep.subr.mxu0 0.0
    %v397 = vand.u32 %v48, 4294901760
    %v398 = vsub.f32 %v48, %v397
    %v399 = vand.u32 %v398, 4294901760
    %400 = vmatpush1.msra.mxu0 %v399
    %401 = vmatprep.subr.mxu0 0.0
    %402 = vmatpush2.msra.mxu0 0.0
    %403 = vmatprep.subr.mxu0 0.0
    %404 = vmatpush2.msra.mxu0 0.0
    %405 = vmatprep.subr.mxu0 0.0
    %406 = vmatpush2.msra.mxu0 0.0
    %407 = vmatprep.subr.mxu0 0.0
    %408 = vmatpush2.msra.mxu0 0.0
    %409 = vmatprep.subr.mxu0 0.0
    %410 = vmatpush2.msra.mxu0 0.0
    %411 = vmatprep.subr.mxu0 0.0
    %412 = vmatpush2.msra.mxu0 0.0
    %413 = vmatprep.subr.mxu0 0.0
    %414 = vmatpush2.msra.mxu0 0.0
    %415 = vmatprep.subr.mxu0 0.0
    %416 = vmatpush2.msra.mxu0 0.0
    %417 = vmatprep.subr.mxu0 0.0
    %418 = vmatpush2.msra.mxu0 0.0
    %419 = vmatprep.subr.mxu0 0.0
    %420 = vmatpush2.msra.mxu0 0.0
    %421 = vmatprep.subr.mxu0 0.0
    %422 = vmatpush2.msra.mxu0 0.0
    %423 = vmatprep.subr.mxu0 0.0
    %424 = vmatpush2.msra.mxu0 0.0
    %425 = vmatprep.subr.mxu0 0.0
    %426 = vmatpush2.msra.mxu0 0.0
    %427 = vmatprep.subr.mxu0 0.0
    %428 = vmatpush2.msra.mxu0 0.0
    %429 = vmatprep.subr.mxu0 0.0
    %430 = vmatpush2.msra.mxu0 0.0
    %431 = vmatprep.subr.mxu0 0.0
    %432 = vmatpush2.msra.mxu0 0.0
    %433 = vmatprep.mubr.f32.mxu0 0.0
    %v434 = vand.u32 %v52, 4294901760
    %435 = vmatmul.mubr.f32.gmra.mxu0 %v434
    %v436 = vpop.f32.mrf.mxu0
    %v437 = vadd.f32 %v360, %v436
    %v438 = vpop.f32.mrf.mxu0
    %439 = vdwg.mxu0
    %440 = vmatprep.subr.mxu0 0.0
    %441 = vmatpush1.msra.mxu0 0.0
    %442 = vmatprep.subr.mxu0 0.0
    %443 = vmatpush1.msra.mxu0 0.0
    %444 = vmatprep.subr.mxu0 0.0
    %445 = vmatpush1.msra.mxu0 0.0
    %446 = vmatprep.subr.mxu0 0.0
    %447 = vmatpush1.msra.mxu0 0.0
    %448 = vmatprep.subr.mxu0 0.0
    %449 = vmatpush1.msra.mxu0 0.0
    %450 = vmatprep.subr.mxu0 0.0
    %451 = vmatpush1.msra.mxu0 0.0
    %452 = vmatprep.subr.mxu0 0.0
    %453 = vmatpush1.msra.mxu0 0.0
    %454 = vmatprep.subr.mxu0 0.0
    %455 = vmatpush1.msra.mxu0 0.0
    %456 = vmatprep.subr.mxu0 0.0
    %457 = vmatpush1.msra.mxu0 0.0
    %458 = vmatprep.subr.mxu0 0.0
    %459 = vmatpush1.msra.mxu0 0.0
    %460 = vmatprep.subr.mxu0 0.0
    %461 = vmatpush1.msra.mxu0 0.0
    %462 = vmatprep.subr.mxu0 0.0
    %463 = vmatpush1.msra.mxu0 0.0
    %464 = vmatprep.subr.mxu0 0.0
    %465 = vmatpush1.msra.mxu0 0.0
    %466 = vmatprep.subr.mxu0 0.0
    %467 = vmatpush1.msra.mxu0 0.0
    %468 = vmatprep.subr.mxu0 0.0
    %v469 = vand.u32 %v49, 4294901760
    %470 = vmatpush1.msra.mxu0 %v469
    %471 = vmatprep.subr.mxu0 0.0
    %v472 = vand.u32 %v48, 4294901760
    %473 = vmatpush1.msra.mxu0 %v472
    %474 = vmatprep.subr.mxu0 0.0
    %475 = vmatpush2.msra.mxu0 0.0
    %476 = vmatprep.subr.mxu0 0.0
    %477 = vmatpush2.msra.mxu0 0.0
    %478 = vmatprep.subr.mxu0 0.0
    %479 = vmatpush2.msra.mxu0 0.0
    %480 = vmatprep.subr.mxu0 0.0
    %481 = vmatpush2.msra.mxu0 0.0
    %482 = vmatprep.subr.mxu0 0.0
    %483 = vmatpush2.msra.mxu0 0.0
    %484 = vmatprep.subr.mxu0 0.0
    %485 = vmatpush2.msra.mxu0 0.0
    %486 = vmatprep.subr.mxu0 0.0
    %487 = vmatpush2.msra.mxu0 0.0
    %488 = vmatprep.subr.mxu0 0.0
    %489 = vmatpush2.msra.mxu0 0.0
    %490 = vmatprep.subr.mxu0 0.0
    %491 = vmatpush2.msra.mxu0 0.0
    %492 = vmatprep.subr.mxu0 0.0
    %493 = vmatpush2.msra.mxu0 0.0
    %494 = vmatprep.subr.mxu0 0.0
    %495 = vmatpush2.msra.mxu0 0.0
    %496 = vmatprep.subr.mxu0 0.0
    %497 = vmatpush2.msra.mxu0 0.0
    %498 = vmatprep.subr.mxu0 0.0
    %499 = vmatpush2.msra.mxu0 0.0
    %500 = vmatprep.subr.mxu0 0.0
    %501 = vmatpush2.msra.mxu0 0.0
    %502 = vmatprep.subr.mxu0 0.0
    %503 = vmatpush2.msra.mxu0 0.0
    %504 = vmatprep.subr.mxu0 0.0
    %505 = vmatpush2.msra.mxu0 0.0
    %506 = vmatprep.mubr.f32.mxu0 0.0
    %v507 = vand.u32 %v52, 4294901760
    %508 = vmatmul.mubr.f32.gmra.mxu0 %v507
    %v509 = vpop.f32.mrf.mxu0
    %v510 = vadd.f32 %v437, %v509
    %v511 = vpop.f32.mrf.mxu0
    %512 = vdwg.mxu0
    %v513 = vadd.f32 %v46, %v510
    %514 = vst [vmem:[#allocation2] sm:$0xff] %v513
    // Predicated region
    $region26: #{tpu_custom_call.1} parent=1 // pred_check
      %p515 = pneg %p41
    $region27: #{tpu_custom_call.1} parent=1 // pred_check_branch
      %517 = sbr.rel (%p515) target = $region29
    $region28: #{tpu_custom_call.1} parent=1 // pred_region
      %v518 = vld [vmem:[#allocation2] sm:$0xff]
      %v519 = vld [vmem:[%s2] sm:$0x1]
      %v521 = vlaneseq
      %v522 = vshrl.u32 %v521, 7
      %v523 = vsub.s32 0, %v522
      %v524 = vrot.slane %v519, %v523
      %v526 = vadd.f32 %v518, %v524
      %v527 = vxor.u32 %v526, 2147483648
      %v528 = vmul.f32 %v527, 1.442695
      %v529 = vpow.pop %v528
      %v530 = vadd.f32 %v529, 1.0
      %v531 = vrcp.pop %v530
      %v532 = vmul.f32 1.0, %v531
      %533 = vst [vmem:[#allocation8] sm:$0xff] %v532
    $region29: #{tpu_custom_call.1} parent=1 // pred_fallthru
      _
    // Predicated region
    $region30: #{tpu_custom_call.1} parent=1 // pred_check
      _
    $region31: #{tpu_custom_call.1} parent=1 // pred_check_branch
      %535 = sbr.rel (0) target = $region33
    $region32: #{tpu_custom_call.1} parent=1 // pred_region
      %s537 = ssub.s32 128, 128
      %538 = vsyncadd [#allocation5], %s537
      %s540 = sshll.u32 [#allocation8], 4
      %s541 = int_to_ptr.vmem [resolvable:$true] %s540
      %543 = dma.vmem_to_hbm [thread:$0]  %s541, 128, %s3, [#allocation5]
    $region33: #{tpu_custom_call.1} parent=1 // pred_fallthru
      _
    // Predicated region
    $region34: #{tpu_custom_call.1} parent=1 // pred_check
      _
    $region35: #{tpu_custom_call.1} parent=1 // pred_check_branch
      %545 = sbr.rel (0) target = $region37
    $region36: #{tpu_custom_call.1} parent=1 // pred_region
      %546 = dma.done [#allocation5], 128
    $region37: #{tpu_custom_call.1} parent=1 // pred_fallthru
      _
    %547 = vsyncpa [#allocation4], 1
    %548 = vsyncpa [#allocation7], 1
    %549 = vsyncpa [#allocation5], 1

</llo_original>
